<compile_context>
chip_gen: v5e
topology: v5e:2x2
jax: 0.10.0
libtpu: 0.0.40
codegen_flags: <defaults>
</compile_context>

<pallas_src>
import math
import functools

import jax
import jax.numpy as jnp
from jax import lax
from jax.experimental import pallas as pl
from jax.experimental.pallas import tpu as pltpu


def _pick_head_group(num_head, head_dim):
    """Largest divisor of num_head with Hg * head_dim <= 128 lanes."""
    max_hg = max(1, 128 // head_dim)
    hg = 1
    for c in range(1, max_hg + 1):
        if num_head % c == 0:
            hg = c
    return hg


def _flash_softmax_attention_kernel(
    # scalar prefetch (SMEM)
    flags_ref,  # (B, nk) int32 : 1 iff key tile kt of batch b has unmasked keys
    # inputs
    bias_ref,   # (1, Tk)      f32  : additive mask bias  (-1e6 * (1 - mask))
    q_ref,      # (Hg, Tq, D)  bf16
    k_ref,      # (Hg, Tk, D)  bf16
    v_ref,      # (Hg, Tk, D)  bf16
    # output
    o_ref,      # (Tq, Hg*D)   f32  : lane-packed heads
    # scratch
    q_sc,       # (Hg, Tq, D)  bf16 : pre-scaled Q cache (hoisted out of kt loop)
    m_sc,       # (Hg, Tq, 1)  f32  : running max per head
    l_sc,       # (Hg, Tq, 1)  f32  : running sum per head
    acc_sc,     # (Tq, Hg*D)   f32  : packed un-normalized output accumulator
    *,
    scale,
    num_heads_packed,
    head_dim,
    softmax_dtype,
):
    b = pl.program_id(0)
    kt = pl.program_id(3)
    Hg, D = num_heads_packed, head_dim
    Tq = acc_sc.shape[0]

    @pl.when(kt == 0)
    def _init():
        # Q is resident across the key axis: scale + cast once per (b, g, qt).
        q_sc[...] = (q_ref[...].astype(jnp.float32) * scale).astype(jnp.bfloat16)
        m_sc[...] = jnp.full(m_sc.shape, -jnp.inf, dtype=m_sc.dtype)
        l_sc[...] = jnp.zeros(l_sc.shape, dtype=l_sc.dtype)
        acc_sc[...] = jnp.zeros(acc_sc.shape, dtype=acc_sc.dtype)

    # Skip key tiles that are fully masked for this batch row.
    @pl.when(flags_ref[b, kt] != 0)
    def _update():
        bias = bias_ref[...]                                   # (1, Tk) f32
        pv_parts = []
        alpha_parts = []
        for h in range(Hg):                                    # static unroll
            q = q_sc[h]                                        # (Tq, D) bf16
            k = k_ref[h]                                       # (Tk, D) bf16
            # scores = Q @ K^T, contracting D (no explicit transpose), f32 acc
            s = lax.dot_general(
                q, k, (((1,), (1,)), ((), ())),
                preferred_element_type=jnp.float32)            # (Tq, Tk) f32
            s = s + bias                                       # mask bias, f32

            m_prev = m_sc[h]                                   # (Tq, 1)
            m_new = jnp.maximum(m_prev, jnp.max(s, axis=-1, keepdims=True))
            alpha = jnp.exp(m_prev - m_new)                    # (Tq, 1) f32
            # exp in softmax_dtype (bf16 on v6e/v7x); row-sum accumulated in f32
            p = jnp.exp((s - m_new).astype(softmax_dtype))     # (Tq, Tk)
            l_sc[h] = alpha * l_sc[h] + jnp.sum(
                p, axis=-1, keepdims=True, dtype=jnp.float32)
            m_sc[h] = m_new

            pv = jnp.dot(p.astype(jnp.bfloat16), v_ref[h],
                         preferred_element_type=jnp.float32)   # (Tq, D) f32
            pv_parts.append(pv)
            alpha_parts.append(jnp.broadcast_to(alpha, (Tq, D)))

        # Pack all heads into lanes and do a single full-width acc update.
        pv_packed = jnp.concatenate(pv_parts, axis=-1)         # (Tq, Hg*D)
        alpha_packed = jnp.concatenate(alpha_parts, axis=-1)   # (Tq, Hg*D)
        acc_sc[...] = alpha_packed * acc_sc[...] + pv_packed

    @pl.when(kt == pl.num_programs(3) - 1)
    def _finalize():
        inv_parts = []
        for h in range(Hg):
            l = l_sc[h]                                        # (Tq, 1)
            # l == 0 only if every key tile of this row was fully masked and
            # skipped; guard so the output is 0 there instead of NaN.
            l = jnp.where(l > 0.0, l, 1.0)
            inv_parts.append(
                jnp.broadcast_to(pl.reciprocal(l, approx=True), (Tq, D)))
        inv_packed = jnp.concatenate(inv_parts, axis=-1)       # (Tq, Hg*D)
        o_ref[...] = (acc_sc[...] * inv_packed).astype(o_ref.dtype)


def softmax_attention(Q, K, V, mask, *, head_dim, block_q=256, block_k=1024,
                      softmax_dtype=jnp.bfloat16):
    """Pallas implementation of SoftmaxAttention.forward (default branch).

    Q, K, V : [B, H, L, D] float32 (cast to bf16 internally)
    mask    : [B, L]       float32 (1.0 = keep, 0.0 = masked out)
    returns : [B, H, L, D] float32

    softmax_dtype: use jnp.float32 on v5e (no bf16 EUP); bf16 elsewhere.
    """
    B, H, L, D = Q.shape
    assert D == head_dim

    Tq = min(block_q, L)
    Tk = min(block_k, L)
    assert L % Tq == 0 and L % Tk == 0, "seq_len must be divisible by tiles"
    # (8,128) tiling constraints: Tk is the lane dim of the bias block,
    # Tq is the sublane dim of the Q/output blocks.
    assert Tk == L or Tk % 128 == 0, "block_k must be a multiple of 128 (or L)"
    assert Tq == L or Tq % 8 == 0, "block_q must be a multiple of 8 (or L)"
    nq, nk = L // Tq, L // Tk

    Hg = _pick_head_group(H, D)      # heads packed per grid step
    G = H // Hg                      # head groups

    # bf16 inputs: halves K/V HBM streaming (re-read nq times) and Q traffic.
    Qb = Q.astype(jnp.bfloat16)
    Kb = K.astype(jnp.bfloat16)
    Vb = V.astype(jnp.bfloat16)

    maskf = mask.astype(jnp.float32)
    # Additive mask bias, applied in f32 inside the kernel.
    bias = (-1000000.0 * (1.0 - maskf)).reshape(B, 1, L)
    # Per-(batch, key-tile) "any unmasked key" flag -> scalar prefetch (SMEM).
    flags = (jnp.max(maskf.reshape(B, nk, Tk), axis=-1) > 0.0).astype(jnp.int32)

    kernel = functools.partial(
        _flash_softmax_attention_kernel,
        scale=1.0 / math.sqrt(head_dim),
        num_heads_packed=Hg,
        head_dim=D,
        softmax_dtype=softmax_dtype,
    )

    cost = pl.CostEstimate(
        flops=4 * B * H * L * L * D,              # QK^T and P@V
        transcendentals=B * H * L * L,            # exp on the scores
        bytes_accessed=(
            B * H * L * D * 2                     # Q (bf16), read once
            + 2 * B * H * L * D * 2 * nq          # K and V (bf16), re-streamed nq times
            + B * H * L * D * 4                   # packed f32 output
            + B * G * nq * L * 4                  # bias re-read per (g, qt)
        ),
    )

    out_packed = pl.pallas_call(
        kernel,
        out_shape=jax.ShapeDtypeStruct((B, G, L, Hg * D), jnp.float32),
        grid_spec=pltpu.PrefetchScalarGridSpec(
            num_scalar_prefetch=1,                # flags
            grid=(B, G, nq, nk),
            in_specs=[
                # additive mask bias [B, 1, L] -> (1, Tk)
                pl.BlockSpec((None, 1, Tk),
                             lambda b, g, qt, kt, flags: (b, 0, kt)),
                # Q [B, H, L, D] -> (Hg, Tq, D); resident across the key axis
                pl.BlockSpec((None, Hg, Tq, D),
                             lambda b, g, qt, kt, flags: (b, g, qt, 0)),
                # K [B, H, L, D] -> (Hg, Tk, D)
                pl.BlockSpec((None, Hg, Tk, D),
                             lambda b, g, qt, kt, flags: (b, g, kt, 0)),
                # V [B, H, L, D] -> (Hg, Tk, D)
                pl.BlockSpec((None, Hg, Tk, D),
                             lambda b, g, qt, kt, flags: (b, g, kt, 0)),
            ],
            # lane-packed output [B, G, L, Hg*D] -> (Tq, Hg*D)
            out_specs=pl.BlockSpec((None, None, Tq, Hg * D),
                                   lambda b, g, qt, kt, flags: (b, g, qt, 0)),
            scratch_shapes=[
                pltpu.VMEM((Hg, Tq, D), jnp.bfloat16),   # pre-scaled Q cache
                pltpu.VMEM((Hg, Tq, 1), jnp.float32),    # running max
                pltpu.VMEM((Hg, Tq, 1), jnp.float32),    # running sum
                pltpu.VMEM((Tq, Hg * D), jnp.float32),   # packed accumulator
            ],
        ),
        compiler_params=pltpu.CompilerParams(
            dimension_semantics=("parallel", "parallel", "parallel", "arbitrary"),
            vmem_limit_bytes=32 * 1024 * 1024,
        ),
        cost_estimate=cost,
    )(flags, bias, Qb, Kb, Vb)

    # Unpack [B, G, L, Hg*D] -> [B, H, L, D] (head h = g*Hg + h_local).
    out = out_packed.reshape(B, G, L, Hg, D).transpose(0, 1, 3, 2, 4)
    return out.reshape(B, H, L, D)


def _reference(Q, K, V, mask, head_dim):
    dot = jnp.einsum("bhld,bhkd->bhlk", Q, K) / math.sqrt(head_dim)
    dot = dot - 1000000.0 * (1.0 - mask[:, None, None, :])
    attn = jax.nn.softmax(dot, axis=-1)
    return jnp.einsum("bhlk,bhkd->bhld", attn, V)


def _run_case(key, B, H, L, D, block_q, block_k, masked_tail):
    kq, kk, kv = jax.random.split(key, 3)
    Q = jax.random.normal(kq, (B, H, L, D), dtype=jnp.float32)
    K = jax.random.normal(kk, (B, H, L, D), dtype=jnp.float32)
    V = jax.random.normal(kv, (B, H, L, D), dtype=jnp.float32)
    mask = jnp.ones((B, L), dtype=jnp.float32)
    if masked_tail > 0:
        mask = mask.at[0, L - masked_tail:].set(0.0)

    X = softmax_attention(Q, K, V, mask, head_dim=D,
                          block_q=block_q, block_k=block_k)
    X = jax.block_until_ready(X)

    X_ref = _reference(Q, K, V, mask, D)
    assert X.shape == (B, H, L, D)
    err = jnp.max(jnp.abs(X - X_ref))
    # bf16 MXU operands + bf16 softmax -> loosened tolerance vs f32 reference
    assert jnp.allclose(X, X_ref, atol=5e-2, rtol=5e-2), (
        f"mismatch vs reference, max abs err = {err}"
    )


if __name__ == "__main__":
    key = jax.random.PRNGKey(0)
    k1, k2, k3 = jax.random.split(key, 3)

    # Small shape consistent with the module: batch=2, num_head=2, seq_len=8,
    # head_dim=32 (single tile; Hg=2 head packing, partial mask on batch 0).
    _run_case(k1, B=2, H=2, L=8, D=32, block_q=256, block_k=1024, masked_tail=2)

    # Multi-tile flash accumulation: nq = nk = 2, partially masked key tile.
    _run_case(k2, B=1, H=2, L=256, D=32, block_q=128, block_k=128, masked_tail=64)

    # Full 128-lane head packing (Hg=4) + a fully-masked key tile -> exercises
    # the scalar-prefetch skip path and the l==0-safe finalize.
    _run_case(k3, B=1, H=4, L=256, D=32, block_q=128, block_k=128, masked_tail=128)

    print("KERNEL_OK")
</pallas_src>

<mosaic_0001>
module attributes {stable_mosaic.version = 11 : i64} {
  func.func @_flash_softmax_attention_kernel(%arg0: i32, %arg1: i32, %arg2: i32, %arg3: i32, %arg4: memref<2x1xi32, #tpu.memory_space<smem>>, %arg5: memref<1x1x8xf32, #tpu.memory_space<vmem>>, %arg6: memref<1x2x8x32xbf16, #tpu.memory_space<vmem>>, %arg7: memref<1x2x8x32xbf16, #tpu.memory_space<vmem>>, %arg8: memref<1x2x8x32xbf16, #tpu.memory_space<vmem>>, %arg9: memref<1x1x8x64xf32, #tpu.memory_space<vmem>>, %arg10: memref<2x8x32xbf16, #tpu.memory_space<vmem>>, %arg11: memref<2x8x1xf32, #tpu.memory_space<vmem>>, %arg12: memref<2x8x1xf32, #tpu.memory_space<vmem>>, %arg13: memref<8x64xf32, #tpu.memory_space<vmem>>) attributes {dimension_semantics = [#tpu.dimension_semantics<parallel>, #tpu.dimension_semantics<parallel>, #tpu.dimension_semantics<parallel>, #tpu.dimension_semantics<arbitrary>], iteration_bounds = array<i64: 2, 1, 1, 1>, scalar_prefetch = 1 : i64, scratch_operands = 4 : i64, tpu.core_type = #tpu.core_type<tc>, window_params = [{transform_indices = @transform_0, window_bounds = array<i64: 1, 1, 8>}, {transform_indices = @transform_1, window_bounds = array<i64: 1, 2, 8, 32>}, {transform_indices = @transform_2, window_bounds = array<i64: 1, 2, 8, 32>}, {transform_indices = @transform_3, window_bounds = array<i64: 1, 2, 8, 32>}, {transform_indices = @transform_4, window_bounds = array<i64: 1, 1, 8, 64>}]} {
    %c0_i32 = arith.constant 0 : i32
    %0 = arith.cmpi eq, %arg3, %c0_i32 : i32
    %1 = arith.extui %0 : i1 to i32
    %c0_i32_0 = arith.constant 0 : i32
    %2 = arith.cmpi ne, %1, %c0_i32_0 : i32
    scf.if %2 {
      %c0 = arith.constant 0 : index
      %c0_5 = arith.constant 0 : index
      %c0_6 = arith.constant 0 : index
      %c0_7 = arith.constant 0 : index
      %12 = vector.load %arg6[%c0, %c0_5, %c0_6, %c0_7] : memref<1x2x8x32xbf16, #tpu.memory_space<vmem>>, vector<1x2x8x32xbf16>
      %13 = vector.shape_cast %12 : vector<1x2x8x32xbf16> to vector<2x8x32xbf16>
      %14 = arith.extf %13 : vector<2x8x32xbf16> to vector<2x8x32xf32>
      %cst = arith.constant 0.176776692 : f32
      %15 = vector.broadcast %cst : f32 to vector<2x8x32xf32>
      %16 = arith.mulf %14, %15 : vector<2x8x32xf32>
      %17 = arith.truncf %16 : vector<2x8x32xf32> to vector<2x8x32xbf16>
      %c0_8 = arith.constant 0 : index
      %c0_9 = arith.constant 0 : index
      %c0_10 = arith.constant 0 : index
      %18 = vector.load %arg10[%c0_8, %c0_9, %c0_10] : memref<2x8x32xbf16, #tpu.memory_space<vmem>>, vector<2x8x32xbf16>
      tpu.vector_store %arg10[%c0_8, %c0_9, %c0_10], %17 {strides = array<i32>} : memref<2x8x32xbf16, #tpu.memory_space<vmem>>, vector<2x8x32xbf16>,
      %cst_11 = arith.constant 0xFF800000 : f32
      %19 = vector.broadcast %cst_11 : f32 to vector<2x8x1xf32>
      %c0_12 = arith.constant 0 : index
      %c0_13 = arith.constant 0 : index
      %c0_14 = arith.constant 0 : index
      %20 = vector.load %arg11[%c0_12, %c0_13, %c0_14] : memref<2x8x1xf32, #tpu.memory_space<vmem>>, vector<2x8x1xf32>
      tpu.vector_store %arg11[%c0_12, %c0_13, %c0_14], %19 {strides = array<i32>} : memref<2x8x1xf32, #tpu.memory_space<vmem>>, vector<2x8x1xf32>,
      %cst_15 = arith.constant 0.000000e+00 : f32
      %21 = vector.broadcast %cst_15 : f32 to vector<2x8x1xf32>
      %c0_16 = arith.constant 0 : index
      %c0_17 = arith.constant 0 : index
      %c0_18 = arith.constant 0 : index
      %22 = vector.load %arg12[%c0_16, %c0_17, %c0_18] : memref<2x8x1xf32, #tpu.memory_space<vmem>>, vector<2x8x1xf32>
      tpu.vector_store %arg12[%c0_16, %c0_17, %c0_18], %21 {strides = array<i32>} : memref<2x8x1xf32, #tpu.memory_space<vmem>>, vector<2x8x1xf32>,
      %cst_19 = arith.constant 0.000000e+00 : f32
      %23 = vector.broadcast %cst_19 : f32 to vector<8x64xf32>
      %c0_20 = arith.constant 0 : index
      %c0_21 = arith.constant 0 : index
      %24 = vector.load %arg13[%c0_20, %c0_21] : memref<8x64xf32, #tpu.memory_space<vmem>>, vector<8x64xf32>
      tpu.vector_store %arg13[%c0_20, %c0_21], %23 {strides = array<i32>} : memref<8x64xf32, #tpu.memory_space<vmem>>, vector<8x64xf32>,
    } else {
    }
    %3 = arith.index_cast %arg0 : i32 to index
    %4 = arith.index_cast %arg3 : i32 to index
    %5 = memref.load %arg4[%3, %4] : memref<2x1xi32, #tpu.memory_space<smem>>
    %c0_i32_1 = arith.constant 0 : i32
    %6 = arith.cmpi ne, %5, %c0_i32_1 : i32
    %7 = arith.extui %6 : i1 to i32
    %c0_i32_2 = arith.constant 0 : i32
    %8 = arith.cmpi ne, %7, %c0_i32_2 : i32
    scf.if %8 {
      %c0 = arith.constant 0 : index
      %c0_5 = arith.constant 0 : index
      %c0_6 = arith.constant 0 : index
      %12 = vector.load %arg5[%c0, %c0_5, %c0_6] : memref<1x1x8xf32, #tpu.memory_space<vmem>>, vector<1x1x8xf32>
      %13 = vector.shape_cast %12 : vector<1x1x8xf32> to vector<1x8xf32>
      %c0_7 = arith.constant 0 : index
      %c0_8 = arith.constant 0 : index
      %c0_9 = arith.constant 0 : index
      %14 = vector.load %arg10[%c0_7, %c0_8, %c0_9] : memref<2x8x32xbf16, #tpu.memory_space<vmem>>, vector<1x8x32xbf16>
      %15 = vector.shape_cast %14 : vector<1x8x32xbf16> to vector<8x32xbf16>
      %c0_10 = arith.constant 0 : index
      %c0_11 = arith.constant 0 : index
      %c0_12 = arith.constant 0 : index
      %c0_13 = arith.constant 0 : index
      %16 = vector.load %arg7[%c0_10, %c0_11, %c0_12, %c0_13] : memref<1x2x8x32xbf16, #tpu.memory_space<vmem>>, vector<1x1x8x32xbf16>
      %17 = vector.shape_cast %16 : vector<1x1x8x32xbf16> to vector<8x32xbf16>
      %cst = arith.constant dense<0.000000e+00> : vector<8x8xf32>
      %18 = tpu.matmul %15, %17, %cst {dimension_numbers = #tpu.dot_dimension_numbers<[1], [1], [0], [0], [0, 0, 1, 0], [], []>} : vector<8x32xbf16>, vector<8x32xbf16>, vector<8x8xf32> -> vector<8x8xf32>
      %19 = vector.broadcast %13 : vector<1x8xf32> to vector<8x8xf32>
      %20 = arith.addf %18, %19 : vector<8x8xf32>
      %c0_14 = arith.constant 0 : index
      %c0_15 = arith.constant 0 : index
      %c0_16 = arith.constant 0 : index
      %21 = vector.load %arg11[%c0_14, %c0_15, %c0_16] : memref<2x8x1xf32, #tpu.memory_space<vmem>>, vector<1x8x1xf32>
      %22 = vector.shape_cast %21 : vector<1x8x1xf32> to vector<8x1xf32>
      %cst_17 = arith.constant dense<0xFF800000> : vector<8xf32>
      %23 = vector.multi_reduction <maximumf>, %20, %cst_17 [1] : vector<8x8xf32> to vector<8xf32>
      %24 = vector.shape_cast %23 : vector<8xf32> to vector<8x1xf32>
      %25 = arith.maximumf %22, %24 : vector<8x1xf32>
      %26 = arith.subf %22, %25 : vector<8x1xf32>
      %27 = math.exp %26 : vector<8x1xf32>
      %28 = vector.broadcast %25 : vector<8x1xf32> to vector<8x8xf32>
      %29 = arith.subf %20, %28 : vector<8x8xf32>
      %30 = arith.truncf %29 : vector<8x8xf32> to vector<8x8xbf16>
      %31 = math.exp %30 : vector<8x8xbf16>
      %c0_18 = arith.constant 0 : index
      %c0_19 = arith.constant 0 : index
      %c0_20 = arith.constant 0 : index
      %32 = vector.load %arg12[%c0_18, %c0_19, %c0_20] : memref<2x8x1xf32, #tpu.memory_space<vmem>>, vector<1x8x1xf32>
      %33 = vector.shape_cast %32 : vector<1x8x1xf32> to vector<8x1xf32>
      %34 = arith.mulf %27, %33 : vector<8x1xf32>
      %35 = arith.extf %31 : vector<8x8xbf16> to vector<8x8xf32>
      %cst_21 = arith.constant dense<0.000000e+00> : vector<8xf32>
      %36 = vector.multi_reduction <add>, %35, %cst_21 [1] : vector<8x8xf32> to vector<8xf32>
      %37 = vector.shape_cast %36 : vector<8xf32> to vector<8x1xf32>
      %38 = arith.addf %34, %37 : vector<8x1xf32>
      %c0_22 = arith.constant 0 : index
      %c0_23 = arith.constant 0 : index
      %c0_24 = arith.constant 0 : index
      %39 = vector.load %arg12[%c0_22, %c0_23, %c0_24] : memref<2x8x1xf32, #tpu.memory_space<vmem>>, vector<1x8x1xf32>
      %40 = vector.shape_cast %39 : vector<1x8x1xf32> to vector<8x1xf32>
      %41 = vector.shape_cast %38 : vector<8x1xf32> to vector<1x8x1xf32>
      tpu.vector_store %arg12[%c0_22, %c0_23, %c0_24], %41 {strides = array<i32>} : memref<2x8x1xf32, #tpu.memory_space<vmem>>, vector<1x8x1xf32>,
      %c0_25 = arith.constant 0 : index
      %c0_26 = arith.constant 0 : index
      %c0_27 = arith.constant 0 : index
      %42 = vector.load %arg11[%c0_25, %c0_26, %c0_27] : memref<2x8x1xf32, #tpu.memory_space<vmem>>, vector<1x8x1xf32>
      %43 = vector.shape_cast %42 : vector<1x8x1xf32> to vector<8x1xf32>
      %44 = vector.shape_cast %25 : vector<8x1xf32> to vector<1x8x1xf32>
      tpu.vector_store %arg11[%c0_25, %c0_26, %c0_27], %44 {strides = array<i32>} : memref<2x8x1xf32, #tpu.memory_space<vmem>>, vector<1x8x1xf32>,
      %c0_28 = arith.constant 0 : index
      %c0_29 = arith.constant 0 : index
      %c0_30 = arith.constant 0 : index
      %c0_31 = arith.constant 0 : index
      %45 = vector.load %arg8[%c0_28, %c0_29, %c0_30, %c0_31] : memref<1x2x8x32xbf16, #tpu.memory_space<vmem>>, vector<1x1x8x32xbf16>
      %46 = vector.shape_cast %45 : vector<1x1x8x32xbf16> to vector<8x32xbf16>
      %cst_32 = arith.constant dense<0.000000e+00> : vector<8x32xf32>
      %47 = tpu.matmul %31, %46, %cst_32 {dimension_numbers = #tpu.dot_dimension_numbers<[1], [0], [0], [1], [0, 0, 1, 1], [], []>} : vector<8x8xbf16>, vector<8x32xbf16>, vector<8x32xf32> -> vector<8x32xf32>
      %48 = vector.shape_cast %27 : vector<8x1xf32> to vector<8x1xf32>
      %49 = vector.broadcast %48 : vector<8x1xf32> to vector<8x32xf32>
      %c1 = arith.constant 1 : index
      %c0_33 = arith.constant 0 : index
      %c0_34 = arith.constant 0 : index
      %50 = vector.load %arg10[%c1, %c0_33, %c0_34] : memref<2x8x32xbf16, #tpu.memory_space<vmem>>, vector<1x8x32xbf16>
      %51 = vector.shape_cast %50 : vector<1x8x32xbf16> to vector<8x32xbf16>
      %c0_35 = arith.constant 0 : index
      %c1_36 = arith.constant 1 : index
      %c0_37 = arith.constant 0 : index
      %c0_38 = arith.constant 0 : index
      %52 = vector.load %arg7[%c0_35, %c1_36, %c0_37, %c0_38] : memref<1x2x8x32xbf16, #tpu.memory_space<vmem>>, vector<1x1x8x32xbf16>
      %53 = vector.shape_cast %52 : vector<1x1x8x32xbf16> to vector<8x32xbf16>
      %cst_39 = arith.constant dense<0.000000e+00> : vector<8x8xf32>
      %54 = tpu.matmul %51, %53, %cst_39 {dimension_numbers = #tpu.dot_dimension_numbers<[1], [1], [0], [0], [0, 0, 1, 0], [], []>} : vector<8x32xbf16>, vector<8x32xbf16>, vector<8x8xf32> -> vector<8x8xf32>
      %55 = vector.broadcast %13 : vector<1x8xf32> to vector<8x8xf32>
      %56 = arith.addf %54, %55 : vector<8x8xf32>
      %c1_40 = arith.constant 1 : index
      %c0_41 = arith.constant 0 : index
      %c0_42 = arith.constant 0 : index
      %57 = vector.load %arg11[%c1_40, %c0_41, %c0_42] : memref<2x8x1xf32, #tpu.memory_space<vmem>>, vector<1x8x1xf32>
      %58 = vector.shape_cast %57 : vector<1x8x1xf32> to vector<8x1xf32>
      %cst_43 = arith.constant dense<0xFF800000> : vector<8xf32>
      %59 = vector.multi_reduction <maximumf>, %56, %cst_43 [1] : vector<8x8xf32> to vector<8xf32>
      %60 = vector.shape_cast %59 : vector<8xf32> to vector<8x1xf32>
      %61 = arith.maximumf %58, %60 : vector<8x1xf32>
      %62 = arith.subf %58, %61 : vector<8x1xf32>
      %63 = math.exp %62 : vector<8x1xf32>
      %64 = vector.broadcast %61 : vector<8x1xf32> to vector<8x8xf32>
      %65 = arith.subf %56, %64 : vector<8x8xf32>
      %66 = arith.truncf %65 : vector<8x8xf32> to vector<8x8xbf16>
      %67 = math.exp %66 : vector<8x8xbf16>
      %c1_44 = arith.constant 1 : index
      %c0_45 = arith.constant 0 : index
      %c0_46 = arith.constant 0 : index
      %68 = vector.load %arg12[%c1_44, %c0_45, %c0_46] : memref<2x8x1xf32, #tpu.memory_space<vmem>>, vector<1x8x1xf32>
      %69 = vector.shape_cast %68 : vector<1x8x1xf32> to vector<8x1xf32>
      %70 = arith.mulf %63, %69 : vector<8x1xf32>
      %71 = arith.extf %67 : vector<8x8xbf16> to vector<8x8xf32>
      %cst_47 = arith.constant dense<0.000000e+00> : vector<8xf32>
      %72 = vector.multi_reduction <add>, %71, %cst_47 [1] : vector<8x8xf32> to vector<8xf32>
      %73 = vector.shape_cast %72 : vector<8xf32> to vector<8x1xf32>
      %74 = arith.addf %70, %73 : vector<8x1xf32>
      %c1_48 = arith.constant 1 : index
      %c0_49 = arith.constant 0 : index
      %c0_50 = arith.constant 0 : index
      %75 = vector.load %arg12[%c1_48, %c0_49, %c0_50] : memref<2x8x1xf32, #tpu.memory_space<vmem>>, vector<1x8x1xf32>
      %76 = vector.shape_cast %75 : vector<1x8x1xf32> to vector<8x1xf32>
      %77 = vector.shape_cast %74 : vector<8x1xf32> to vector<1x8x1xf32>
      tpu.vector_store %arg12[%c1_48, %c0_49, %c0_50], %77 {strides = array<i32>} : memref<2x8x1xf32, #tpu.memory_space<vmem>>, vector<1x8x1xf32>,
      %c1_51 = arith.constant 1 : index
      %c0_52 = arith.constant 0 : index
      %c0_53 = arith.constant 0 : index
      %78 = vector.load %arg11[%c1_51, %c0_52, %c0_53] : memref<2x8x1xf32, #tpu.memory_space<vmem>>, vector<1x8x1xf32>
      %79 = vector.shape_cast %78 : vector<1x8x1xf32> to vector<8x1xf32>
      %80 = vector.shape_cast %61 : vector<8x1xf32> to vector<1x8x1xf32>
      tpu.vector_store %arg11[%c1_51, %c0_52, %c0_53], %80 {strides = array<i32>} : memref<2x8x1xf32, #tpu.memory_space<vmem>>, vector<1x8x1xf32>,
      %c0_54 = arith.constant 0 : index
      %c1_55 = arith.constant 1 : index
      %c0_56 = arith.constant 0 : index
      %c0_57 = arith.constant 0 : index
      %81 = vector.load %arg8[%c0_54, %c1_55, %c0_56, %c0_57] : memref<1x2x8x32xbf16, #tpu.memory_space<vmem>>, vector<1x1x8x32xbf16>
      %82 = vector.shape_cast %81 : vector<1x1x8x32xbf16> to vector<8x32xbf16>
      %cst_58 = arith.constant dense<0.000000e+00> : vector<8x32xf32>
      %83 = tpu.matmul %67, %82, %cst_58 {dimension_numbers = #tpu.dot_dimension_numbers<[1], [0], [0], [1], [0, 0, 1, 1], [], []>} : vector<8x8xbf16>, vector<8x32xbf16>, vector<8x32xf32> -> vector<8x32xf32>
      %84 = vector.shape_cast %63 : vector<8x1xf32> to vector<8x1xf32>
      %85 = vector.broadcast %84 : vector<8x1xf32> to vector<8x32xf32>
      %86 = tpu.concatenate %47, %83 in 1 : vector<8x32xf32>, vector<8x32xf32> -> vector<8x64xf32>
      %87 = tpu.concatenate %49, %85 in 1 : vector<8x32xf32>, vector<8x32xf32> -> vector<8x64xf32>
      %c0_59 = arith.constant 0 : index
      %c0_60 = arith.constant 0 : index
      %88 = vector.load %arg13[%c0_59, %c0_60] : memref<8x64xf32, #tpu.memory_space<vmem>>, vector<8x64xf32>
      %89 = arith.mulf %87, %88 : vector<8x64xf32>
      %90 = arith.addf %89, %86 : vector<8x64xf32>
      %c0_61 = arith.constant 0 : index
      %c0_62 = arith.constant 0 : index
      %91 = vector.load %arg13[%c0_61, %c0_62] : memref<8x64xf32, #tpu.memory_space<vmem>>, vector<8x64xf32>
      tpu.vector_store %arg13[%c0_61, %c0_62], %90 {strides = array<i32>} : memref<8x64xf32, #tpu.memory_space<vmem>>, vector<8x64xf32>,
    } else {
    }
    %c0_i32_3 = arith.constant 0 : i32
    %9 = arith.cmpi eq, %arg3, %c0_i32_3 : i32
    %10 = arith.extui %9 : i1 to i32
    %c0_i32_4 = arith.constant 0 : i32
    %11 = arith.cmpi ne, %10, %c0_i32_4 : i32
    scf.if %11 {
      %c0 = arith.constant 0 : index
      %c0_5 = arith.constant 0 : index
      %c0_6 = arith.constant 0 : index
      %12 = vector.load %arg12[%c0, %c0_5, %c0_6] : memref<2x8x1xf32, #tpu.memory_space<vmem>>, vector<1x8x1xf32>
      %13 = vector.shape_cast %12 : vector<1x8x1xf32> to vector<8x1xf32>
      %cst = arith.constant 0.000000e+00 : f32
      %14 = vector.broadcast %cst : f32 to vector<8x1xf32>
      %15 = arith.cmpf ogt, %13, %14 : vector<8x1xf32>
      %cst_7 = arith.constant 1.000000e+00 : f32
      %16 = vector.broadcast %cst_7 : f32 to vector<8x1xf32>
      %17 = arith.select %15, %13, %16 : vector<8x1xi1>, vector<8x1xf32>
      %18 = tpu.reciprocal %17 {approx = true} : vector<8x1xf32> -> vector<8x1xf32>
      %19 = vector.shape_cast %18 : vector<8x1xf32> to vector<8x1xf32>
      %20 = vector.broadcast %19 : vector<8x1xf32> to vector<8x32xf32>
      %c1 = arith.constant 1 : index
      %c0_8 = arith.constant 0 : index
      %c0_9 = arith.constant 0 : index
      %21 = vector.load %arg12[%c1, %c0_8, %c0_9] : memref<2x8x1xf32, #tpu.memory_space<vmem>>, vector<1x8x1xf32>
      %22 = vector.shape_cast %21 : vector<1x8x1xf32> to vector<8x1xf32>
      %cst_10 = arith.constant 0.000000e+00 : f32
      %23 = vector.broadcast %cst_10 : f32 to vector<8x1xf32>
      %24 = arith.cmpf ogt, %22, %23 : vector<8x1xf32>
      %cst_11 = arith.constant 1.000000e+00 : f32
      %25 = vector.broadcast %cst_11 : f32 to vector<8x1xf32>
      %26 = arith.select %24, %22, %25 : vector<8x1xi1>, vector<8x1xf32>
      %27 = tpu.reciprocal %26 {approx = true} : vector<8x1xf32> -> vector<8x1xf32>
      %28 = vector.shape_cast %27 : vector<8x1xf32> to vector<8x1xf32>
      %29 = vector.broadcast %28 : vector<8x1xf32> to vector<8x32xf32>
      %30 = tpu.concatenate %20, %29 in 1 : vector<8x32xf32>, vector<8x32xf32> -> vector<8x64xf32>
      %c0_12 = arith.constant 0 : index
      %c0_13 = arith.constant 0 : index
      %31 = vector.load %arg13[%c0_12, %c0_13] : memref<8x64xf32, #tpu.memory_space<vmem>>, vector<8x64xf32>
      %32 = arith.mulf %31, %30 : vector<8x64xf32>
      %c0_14 = arith.constant 0 : index
      %c0_15 = arith.constant 0 : index
      %c0_16 = arith.constant 0 : index
      %c0_17 = arith.constant 0 : index
      %33 = vector.load %arg9[%c0_14, %c0_15, %c0_16, %c0_17] : memref<1x1x8x64xf32, #tpu.memory_space<vmem>>, vector<1x1x8x64xf32>
      %34 = vector.shape_cast %33 : vector<1x1x8x64xf32> to vector<8x64xf32>
      %35 = vector.shape_cast %32 : vector<8x64xf32> to vector<1x1x8x64xf32>
      tpu.vector_store %arg9[%c0_14, %c0_15, %c0_16, %c0_17], %35 {strides = array<i32>} : memref<1x1x8x64xf32, #tpu.memory_space<vmem>>, vector<1x1x8x64xf32>,
    } else {
    }
    return
  }
  func.func @transform_0(%arg0: i32, %arg1: i32, %arg2: i32, %arg3: i32, %arg4: memref<2x1xi32, #tpu.memory_space<smem>>) -> (i32, i32, i32) {
    %c0_i32 = arith.constant 0 : i32
    %c0_i32_0 = arith.constant 0 : i32
    return %arg0, %c0_i32, %arg3 : i32, i32, i32
  }
  func.func @transform_1(%arg0: i32, %arg1: i32, %arg2: i32, %arg3: i32, %arg4: memref<2x1xi32, #tpu.memory_space<smem>>) -> (i32, i32, i32, i32) {
    %c0_i32 = arith.constant 0 : i32
    %c0_i32_0 = arith.constant 0 : i32
    return %arg0, %arg1, %arg2, %c0_i32 : i32, i32, i32, i32
  }
  func.func @transform_2(%arg0: i32, %arg1: i32, %arg2: i32, %arg3: i32, %arg4: memref<2x1xi32, #tpu.memory_space<smem>>) -> (i32, i32, i32, i32) {
    %c0_i32 = arith.constant 0 : i32
    %c0_i32_0 = arith.constant 0 : i32
    return %arg0, %arg1, %arg3, %c0_i32 : i32, i32, i32, i32
  }
  func.func @transform_3(%arg0: i32, %arg1: i32, %arg2: i32, %arg3: i32, %arg4: memref<2x1xi32, #tpu.memory_space<smem>>) -> (i32, i32, i32, i32) {
    %c0_i32 = arith.constant 0 : i32
    %c0_i32_0 = arith.constant 0 : i32
    return %arg0, %arg1, %arg3, %c0_i32 : i32, i32, i32, i32
  }
  func.func @transform_4(%arg0: i32, %arg1: i32, %arg2: i32, %arg3: i32, %arg4: memref<2x1xi32, #tpu.memory_space<smem>>) -> (i32, i32, i32, i32) {
    %c0_i32 = arith.constant 0 : i32
    %c0_i32_0 = arith.constant 0 : i32
    return %arg0, %arg1, %arg2, %c0_i32 : i32, i32, i32, i32
  }
}

</mosaic_0001>

<llo_original>
// kernel: tpu_custom_call.1
$region0: #{tpu_custom_call.1}
  #allocation0 [shape = 'u32[]', space=smem, size = 0x4, offset = 0x4, fixed_abs, tag = 'smem constant byte address 0x4 - core index']
  #allocation1 [shape = 'u32[72,128]{1,0:T(1,128)}', space=vmem, size = 0x9000, scoped, tag = 'internal scratch']
  #allocation2 [shape = 'bf16[2,8,32]{2,1,0:T(8,128)(2,1)}', space=vmem, size = 0x1000, scoped, tag = 'scratch operand']
  #allocation3 [shape = 'f32[2,8,1]{2,1,0:T(8,128)}', space=vmem, size = 0x2000, scoped, tag = 'scratch operand']
  #allocation4 [shape = 'f32[2,8,1]{2,1,0:T(8,128)}', space=vmem, size = 0x2000, scoped, tag = 'scratch operand']
  #allocation5 [shape = 'f32[8,64]{1,0:T(8,128)}', space=vmem, size = 0x1000, scoped, tag = 'scratch operand']
  #allocation6 [shape = 's32[1]{0}', space=sflag, size = 0x4, scoped, tag = 'scoped memory for tpu_custom_call.1']
  #allocation7 [shape = 'u8[1024]{0}', space=smem, size = 0x400, scoped, tag = 'prefetched SMEM operand 0']
  %s0 = inlined_call_operand.vmem [shape: s32[2,1], index: 0, kind: input, shape index: {}]
  %s1 = inlined_call_operand.vmem [shape: f32[2,1,8], index: 1, kind: input, shape index: {}]
  %s2 = inlined_call_operand.hbm [shape: bf16[2,2,8,32], index: 2, kind: input, shape index: {}]
  %s3 = inlined_call_operand.hbm [shape: bf16[2,2,8,32], index: 3, kind: input, shape index: {}]
  %s4 = inlined_call_operand.hbm [shape: bf16[2,2,8,32], index: 4, kind: input, shape index: {}]
  %s5 = inlined_call_operand.hbm [shape: f32[2,1,8,64], index: 5, kind: output, shape index: {}]
  %s6 = sld [smem:[#allocation0]]
  $region73: #{tpu_custom_call.1} parent=0
    _
  %s8 = ssub.s32 1, %s6
  %s9 = scalar_select 0, %s8, %s6
  %s11 = sshll.u32 %s0, 4
  %s12 = int_to_ptr.vmem [resolvable:$true] %s11
  %14 = dma.vmem_to_smem %s12, 32, [#allocation7], [#allocation6]
  %16 = dma.done [#allocation6], 32
  %17 = sfence
  $region1: #{tpu_custom_call.1} parent=0
    #allocation8 [shape = 'u8[8192]{0}', space=vmem, size = 0x2000, scoped, tag = 'input window, operand 2']
    #allocation9 [shape = 's32[2]{0}', space=sflag, size = 0x8, scoped, tag = 'scoped memory for tpu_custom_call.1']
    #allocation10 [shape = 's32[2]{0}', space=sflag, size = 0x8, scoped, tag = 'scoped memory for tpu_custom_call.1']
    #allocation11 [shape = 'u8[8192]{0}', space=vmem, size = 0x2000, scoped, tag = 'input window, operand 3']
    #allocation12 [shape = 's32[2]{0}', space=sflag, size = 0x8, scoped, tag = 'scoped memory for tpu_custom_call.1']
    #allocation13 [shape = 'u8[8192]{0}', space=vmem, size = 0x2000, scoped, tag = 'input window, operand 4']
    #allocation14 [shape = 'u8[8192]{0}', space=vmem, size = 0x2000, scoped, tag = 'output window, operand 0']
    %18 = vsyncpa [#allocation9], 0
    %s19 = scalar_lea.sflag [#allocation9], 1
    %20 = vsyncpa %s19, 0
    %21 = vsyncpa [#allocation12], 0
    %s22 = scalar_lea.sflag [#allocation12], 1
    %23 = vsyncpa %s22, 0
    %24 = vsyncpa [#allocation10], 0
    %s25 = scalar_lea.sflag [#allocation10], 1
    %26 = vsyncpa %s25, 0
    loop: start=0, step=1, limit=4
    $region2: #{tpu_custom_call.1} parent=1 // loop_pre_header
      _
    $region3: #{tpu_custom_call.1} parent=1 // loop_header
      %s28 = sphi 0, %s32
      %p29 = scmp.ge.s32.totalorder %s28, 4
      %s35 = sphi 0, %s61
      %s36 = sphi 0, %s57
      %s37 = sphi 0, %s53
      %s38 = sphi 0, %s49
      %s39 = sphi 0, %s35
      %s40 = sphi 0, %s36
      %s41 = sphi 0, %s37
      %s42 = sphi 0, %s38
      %s43 = sphi 0, %s39
      %s44 = sphi 0, %s40
      %s45 = sphi 0, %s41
      %s46 = sphi 0, %s42
      %s66 = sphi 0, %s68
      %s69 = sphi 0, %s66
      %s70 = sphi 0, %s69
      %s86 = sphi 0, %s70
      %s96 = sphi 0, %s98
      %s99 = sphi 0, %s96
      %s100 = sphi 0, %s99
      %s116 = sphi 0, %s100
      %s126 = sphi 0, %s128
      %s129 = sphi 0, %s126
      %s130 = sphi 0, %s129
      %s146 = sphi 0, %s130
      %s156 = sphi 0, %s158
      %s159 = sphi 0, %s156
      %s160 = sphi 0, %s159
      %s176 = sphi 0, %s160
      %s186 = sphi 0, %s188
      %s189 = sphi 0, %s186
      %s190 = sphi 0, %s189
      %s206 = sphi 0, %s190
    $region4: #{tpu_custom_call.1} parent=1 // loop_header_branch
      %31 = sbr.rel (%p29) target = $region8
    $region5: #{tpu_custom_call.1} parent=1 // loop_body
      %s33 = ssub.s32 %s28, 1
      %s34 = ssub.s32 %s28, 2
      %s47 = sadd.s32 1, %s38
      %p48 = scmp.ge.s32.totalorder %s47, 1
      %s49 = scalar_select %p48, 0, %s47
      %s50 = sadd.s32 1, %s37
      %s51 = scalar_select %p48, %s50, %s37
      %p52 = scmp.ge.s32.totalorder %s51, 1
      %s53 = scalar_select %p52, 0, %s51
      %s54 = sadd.s32 1, %s36
      %s55 = scalar_select %p52, %s54, %s36
      %p56 = scmp.ge.s32.totalorder %s55, 1
      %s57 = scalar_select %p56, 0, %s55
      %s58 = sadd.s32 1, %s35
      %s59 = scalar_select %p56, %s58, %s35
      %p60 = scmp.ge.s32.totalorder %s59, 2
      %s61 = scalar_select %p60, 0, %s59
      %s62 = ssub.s32 %s35, %s61
      %s63 = ssub.s32 %s38, %s49
      %s64 = sor.u32 %s62, %s63
      %p65 = scmp.eq.s32.totalorder %s64, 0
      %s67 = sadd.s32 %s66, 1
      %s68 = scalar_select %p65, %s66, %s67
      %p71 = pneg %p65
      %p72 = scmp.eq.s32.totalorder %s28, 1
      %p73 = por %p71, %p72
      %p74 = scmp.ne.s32.totalorder %s66, %s69
      %p75 = scmp.eq.s32.totalorder %s28, 0
      %p76 = por %p74, %p75
      %p77 = scmp.ne.s32.totalorder %s66, %s69
      %p78 = scmp.eq.s32.totalorder %s33, 1
      %p79 = por %p77, %p78
      %p80 = scmp.ne.s32.totalorder %s69, %s70
      %p81 = scmp.eq.s32.totalorder %s33, 0
      %p82 = por %p80, %p81
      %p83 = scmp.ne.s32.totalorder %s69, %s70
      %p84 = scmp.eq.s32.totalorder %s34, 1
      %p85 = por %p83, %p84
      %p87 = scmp.ne.s32.totalorder %s70, %s86
      %p88 = scmp.eq.s32.totalorder %s34, 0
      %p89 = por %p87, %p88
      %s90 = ssub.s32 %s35, %s61
      %s91 = ssub.s32 %s36, %s57
      %s92 = sor.u32 %s90, %s91
      %s93 = ssub.s32 %s37, %s53
      %s94 = sor.u32 %s92, %s93
      %p95 = scmp.eq.s32.totalorder %s94, 0
      %s97 = sadd.s32 %s96, 1
      %s98 = scalar_select %p95, %s96, %s97
      %p101 = pneg %p95
      %p102 = scmp.eq.s32.totalorder %s28, 1
      %p103 = por %p101, %p102
      %p104 = scmp.ne.s32.totalorder %s96, %s99
      %p105 = scmp.eq.s32.totalorder %s28, 0
      %p106 = por %p104, %p105
      %p107 = scmp.ne.s32.totalorder %s96, %s99
      %p108 = scmp.eq.s32.totalorder %s33, 1
      %p109 = por %p107, %p108
      %p110 = scmp.ne.s32.totalorder %s99, %s100
      %p111 = scmp.eq.s32.totalorder %s33, 0
      %p112 = por %p110, %p111
      %p113 = scmp.ne.s32.totalorder %s99, %s100
      %p114 = scmp.eq.s32.totalorder %s34, 1
      %p115 = por %p113, %p114
      %p117 = scmp.ne.s32.totalorder %s100, %s116
      %p118 = scmp.eq.s32.totalorder %s34, 0
      %p119 = por %p117, %p118
      %s120 = ssub.s32 %s35, %s61
      %s121 = ssub.s32 %s36, %s57
      %s122 = sor.u32 %s120, %s121
      %s123 = ssub.s32 %s38, %s49
      %s124 = sor.u32 %s122, %s123
      %p125 = scmp.eq.s32.totalorder %s124, 0
      %s127 = sadd.s32 %s126, 1
      %s128 = scalar_select %p125, %s126, %s127
      %p131 = pneg %p125
      %p132 = scmp.eq.s32.totalorder %s28, 1
      %p133 = por %p131, %p132
      %p134 = scmp.ne.s32.totalorder %s126, %s129
      %p135 = scmp.eq.s32.totalorder %s28, 0
      %p136 = por %p134, %p135
      %p137 = scmp.ne.s32.totalorder %s126, %s129
      %p138 = scmp.eq.s32.totalorder %s33, 1
      %p139 = por %p137, %p138
      %p140 = scmp.ne.s32.totalorder %s129, %s130
      %p141 = scmp.eq.s32.totalorder %s33, 0
      %p142 = por %p140, %p141
      %p143 = scmp.ne.s32.totalorder %s129, %s130
      %p144 = scmp.eq.s32.totalorder %s34, 1
      %p145 = por %p143, %p144
      %p147 = scmp.ne.s32.totalorder %s130, %s146
      %p148 = scmp.eq.s32.totalorder %s34, 0
      %p149 = por %p147, %p148
      %s150 = ssub.s32 %s35, %s61
      %s151 = ssub.s32 %s36, %s57
      %s152 = sor.u32 %s150, %s151
      %s153 = ssub.s32 %s38, %s49
      %s154 = sor.u32 %s152, %s153
      %p155 = scmp.eq.s32.totalorder %s154, 0
      %s157 = sadd.s32 %s156, 1
      %s158 = scalar_select %p155, %s156, %s157
      %p161 = pneg %p155
      %p162 = scmp.eq.s32.totalorder %s28, 1
      %p163 = por %p161, %p162
      %p164 = scmp.ne.s32.totalorder %s156, %s159
      %p165 = scmp.eq.s32.totalorder %s28, 0
      %p166 = por %p164, %p165
      %p167 = scmp.ne.s32.totalorder %s156, %s159
      %p168 = scmp.eq.s32.totalorder %s33, 1
      %p169 = por %p167, %p168
      %p170 = scmp.ne.s32.totalorder %s159, %s160
      %p171 = scmp.eq.s32.totalorder %s33, 0
      %p172 = por %p170, %p171
      %p173 = scmp.ne.s32.totalorder %s159, %s160
      %p174 = scmp.eq.s32.totalorder %s34, 1
      %p175 = por %p173, %p174
      %p177 = scmp.ne.s32.totalorder %s160, %s176
      %p178 = scmp.eq.s32.totalorder %s34, 0
      %p179 = por %p177, %p178
      %s180 = ssub.s32 %s35, %s61
      %s181 = ssub.s32 %s36, %s57
      %s182 = sor.u32 %s180, %s181
      %s183 = ssub.s32 %s37, %s53
      %s184 = sor.u32 %s182, %s183
      %p185 = scmp.eq.s32.totalorder %s184, 0
      %s187 = sadd.s32 %s186, 1
      %s188 = scalar_select %p185, %s186, %s187
      %p191 = pneg %p185
      %p192 = scmp.eq.s32.totalorder %s28, 1
      %p193 = por %p191, %p192
      %p194 = scmp.ne.s32.totalorder %s186, %s189
      %p195 = scmp.eq.s32.totalorder %s28, 0
      %p196 = por %p194, %p195
      %p197 = scmp.ne.s32.totalorder %s186, %s189
      %p198 = scmp.eq.s32.totalorder %s33, 1
      %p199 = por %p197, %p198
      %p200 = scmp.ne.s32.totalorder %s189, %s190
      %p201 = scmp.eq.s32.totalorder %s33, 0
      %p202 = por %p200, %p201
      %p203 = scmp.ne.s32.totalorder %s189, %s190
      %p204 = scmp.eq.s32.totalorder %s34, 1
      %p205 = por %p203, %p204
      %p207 = scmp.ne.s32.totalorder %s190, %s206
      %p208 = scmp.eq.s32.totalorder %s34, 0
      %p209 = por %p207, %p208
      %p210 = scmp.le.s32.totalorder 1, %s28
      %p211 = scmp.lt.s32.totalorder %s28, 3
      %p212 = pnand %p210, %p211
      %p213 = pneg %p212
      // Predicated region
      $region9: #{tpu_custom_call.1} parent=5 // pred_check
        _
      $region10: #{tpu_custom_call.1} parent=5 // pred_check_branch
        %215 = sbr.rel (%p212) target = $region12
      $region11: #{tpu_custom_call.1} parent=5 // pred_region
        %s216 = ssub.s32 %s28, 1
      $region12: #{tpu_custom_call.1} parent=5 // pred_fallthru
        _
      %p217 = scmp.lt.s32.totalorder %s28, 2
      // Predicated region
      $region13: #{tpu_custom_call.1} parent=5 // pred_check
        %p218 = pneg %p217
      $region14: #{tpu_custom_call.1} parent=5 // pred_check_branch
        %220 = sbr.rel (%p218) target = $region16
      $region15: #{tpu_custom_call.1} parent=5 // pred_region
        // Predicated region
        $region17: #{tpu_custom_call.1} parent=15 // pred_check
          %p221 = pneg %p76
        $region18: #{tpu_custom_call.1} parent=15 // pred_check_branch
          %223 = sbr.rel (%p221) target = $region20
        $region19: #{tpu_custom_call.1} parent=15 // pred_region
          %p224 = scmp.lt.s32.totalorder %s35, 1
          %s225 = scalar_select %p224, %s35, 1
          %p226 = scmp.lt.s32.totalorder %s38, 0
          %s227 = scalar_select %p226, %s38, 0
          %s228 = sadd.s32 %s227, %s225
          %s229 = scalar_lea.vmem %s1, %s228
        $region20: #{tpu_custom_call.1} parent=15 // pred_fallthru
          _
        // Predicated region
        $region21: #{tpu_custom_call.1} parent=15 // pred_check
          %p230 = pneg %p106
        $region22: #{tpu_custom_call.1} parent=15 // pred_check_branch
          %232 = sbr.rel (%p230) target = $region24
        $region23: #{tpu_custom_call.1} parent=15 // pred_region
          %s233 = sand.u32 %s96, 1
          %s234 = scalar_lea.sflag [#allocation9], %s233
          %s235 = sand.u32 %s96, 1
          %s236 = smul.addr %s235, 8
          %s237 = scalar_lea.vmem [#allocation8], %s236
          %s238 = smul.u32 2, %s36
          %240 = vsyncadd %s234, 0
          %s241 = sadd.s32 %s37, %s238
          %s242 = smul.addr %s35, 2
          %s243 = sadd.s32 %s241, %s242
          %s244 = smul.addr %s243, 4
          %s245 = scalar_lea.hbm %s2, %s244
          %s246 = sshll.u32 %s245, 4
          %s247 = int_to_ptr.hbm [resolvable:$true] %s246
          %s248 = sshll.u32 %s237, 4
          %s249 = int_to_ptr.vmem [resolvable:$true] %s248
          %254 = dma.hbm_to_vmem [thread:$0]  %s247, 128, %s249, %s234, 64, 64, 4
        $region24: #{tpu_custom_call.1} parent=15 // pred_fallthru
          _
        // Predicated region
        $region25: #{tpu_custom_call.1} parent=15 // pred_check
          %p255 = pneg %p136
        $region26: #{tpu_custom_call.1} parent=15 // pred_check_branch
          %257 = sbr.rel (%p255) target = $region28
        $region27: #{tpu_custom_call.1} parent=15 // pred_region
          %s258 = sand.u32 %s28, 1
          %s259 = scalar_lea.sflag [#allocation12], %s258
          %s260 = sand.u32 %s126, 1
          %s261 = smul.addr %s260, 8
          %s262 = scalar_lea.vmem [#allocation11], %s261
          %s263 = smul.u32 2, %s36
          %265 = vsyncadd %s259, 0
          %s266 = sadd.s32 %s38, %s263
          %s267 = smul.addr %s35, 2
          %s268 = sadd.s32 %s266, %s267
          %s269 = smul.addr %s268, 4
          %s270 = scalar_lea.hbm %s3, %s269
          %s271 = sshll.u32 %s270, 4
          %s272 = int_to_ptr.hbm [resolvable:$true] %s271
          %s273 = sshll.u32 %s262, 4
          %s274 = int_to_ptr.vmem [resolvable:$true] %s273
          %279 = dma.hbm_to_vmem [thread:$0]  %s272, 128, %s274, %s259, 64, 64, 4
        $region28: #{tpu_custom_call.1} parent=15 // pred_fallthru
          _
        // Predicated region
        $region29: #{tpu_custom_call.1} parent=15 // pred_check
          %p280 = pneg %p166
        $region30: #{tpu_custom_call.1} parent=15 // pred_check_branch
          %282 = sbr.rel (%p280) target = $region32
        $region31: #{tpu_custom_call.1} parent=15 // pred_region
          %s283 = sand.u32 %s28, 1
          %s284 = scalar_lea.sflag [#allocation12], %s283
          %s285 = sand.u32 %s156, 1
          %s286 = smul.addr %s285, 8
          %s287 = scalar_lea.vmem [#allocation13], %s286
          %s288 = smul.u32 2, %s36
          %290 = vsyncadd %s284, 0
          %s291 = sadd.s32 %s38, %s288
          %s292 = smul.addr %s35, 2
          %s293 = sadd.s32 %s291, %s292
          %s294 = smul.addr %s293, 4
          %s295 = scalar_lea.hbm %s4, %s294
          %s296 = sshll.u32 %s295, 4
          %s297 = int_to_ptr.hbm [resolvable:$true] %s296
          %s298 = sshll.u32 %s287, 4
          %s299 = int_to_ptr.vmem [resolvable:$true] %s298
          %304 = dma.hbm_to_vmem [thread:$0]  %s297, 128, %s299, %s284, 64, 64, 4
        $region32: #{tpu_custom_call.1} parent=15 // pred_fallthru
          _
      $region16: #{tpu_custom_call.1} parent=5 // pred_fallthru
        _
      %p305 = scmp.le.s32.totalorder 1, %s28
      %p306 = scmp.lt.s32.totalorder %s28, 3
      %p307 = pnand %p305, %p306
      %p308 = pneg %p307
      // Predicated region
      $region33: #{tpu_custom_call.1} parent=5 // pred_check
        _
      $region34: #{tpu_custom_call.1} parent=5 // pred_check_branch
        %310 = sbr.rel (%p307) target = $region36
      $region35: #{tpu_custom_call.1} parent=5 // pred_region
        %s311 = ssub.s32 %s28, 1
        %s312 = sand.u32 %s99, 1
        %s313 = scalar_lea.sflag [#allocation9], %s312
        %s314 = sand.u32 %s99, 1
        %s315 = smul.addr %s314, 8
        %s316 = scalar_lea.vmem [#allocation8], %s315
        // Predicated region
        $region37: #{tpu_custom_call.1} parent=35 // pred_check
          %p317 = pneg %p112
        $region38: #{tpu_custom_call.1} parent=35 // pred_check_branch
          %319 = sbr.rel (%p317) target = $region40
        $region39: #{tpu_custom_call.1} parent=35 // pred_region
          %321 = dma.done %s313, 128
        $region40: #{tpu_custom_call.1} parent=35 // pred_fallthru
          _
        %s322 = sand.u32 %s33, 1
        %s323 = scalar_lea.sflag [#allocation12], %s322
        %s324 = sand.u32 %s129, 1
        %s325 = smul.addr %s324, 8
        %s326 = scalar_lea.vmem [#allocation11], %s325
        // Predicated region
        $region41: #{tpu_custom_call.1} parent=35 // pred_check
          %p327 = pneg %p142
        $region42: #{tpu_custom_call.1} parent=35 // pred_check_branch
          %329 = sbr.rel (%p327) target = $region44
        $region43: #{tpu_custom_call.1} parent=35 // pred_region
          %331 = dma.done %s323, 128
        $region44: #{tpu_custom_call.1} parent=35 // pred_fallthru
          _
        %s332 = sand.u32 %s33, 1
        %s333 = scalar_lea.sflag [#allocation12], %s332
        %s334 = sand.u32 %s159, 1
        %s335 = smul.addr %s334, 8
        %s336 = scalar_lea.vmem [#allocation13], %s335
        // Predicated region
        $region45: #{tpu_custom_call.1} parent=35 // pred_check
          %p337 = pneg %p172
        $region46: #{tpu_custom_call.1} parent=35 // pred_check_branch
          %339 = sbr.rel (%p337) target = $region48
        $region47: #{tpu_custom_call.1} parent=35 // pred_region
          %341 = dma.done %s333, 128
        $region48: #{tpu_custom_call.1} parent=35 // pred_fallthru
          _
        %p342 = scmp.lt.s32.totalorder %s39, 1
        %s343 = scalar_select %p342, %s39, 1
        %p344 = scmp.lt.s32.totalorder %s42, 0
        %s345 = scalar_select %p344, %s42, 0
        %s346 = sadd.s32 %s345, %s343
        %s347 = scalar_lea.vmem %s1, %s346
        %p348 = pneg %p82
        %p349 = pneg %p79
        %s350 = sand.u32 %s99, 1
        %s351 = scalar_lea.sflag [#allocation9], %s350
        %s352 = sand.u32 %s99, 1
        %s353 = smul.addr %s352, 8
        %s354 = scalar_lea.vmem [#allocation8], %s353
        %p355 = pneg %p112
        %p356 = pneg %p109
        %s357 = sand.u32 %s33, 1
        %s358 = scalar_lea.sflag [#allocation12], %s357
        %s359 = sand.u32 %s129, 1
        %s360 = smul.addr %s359, 8
        %s361 = scalar_lea.vmem [#allocation11], %s360
        %p362 = pneg %p142
        %p363 = pneg %p139
        %s364 = sand.u32 %s33, 1
        %s365 = scalar_lea.sflag [#allocation12], %s364
        %s366 = sand.u32 %s159, 1
        %s367 = smul.addr %s366, 8
        %s368 = scalar_lea.vmem [#allocation13], %s367
        %p369 = pneg %p172
        %p370 = pneg %p169
        %p371 = pneg %p202
        %p372 = pneg %p199
        %s373 = sand.u32 %s189, 1
        %s374 = scalar_lea.sflag [#allocation10], %s373
        %s375 = sand.u32 %s189, 1
        %s376 = smul.addr %s375, 8
        %s377 = scalar_lea.vmem [#allocation14], %s376
        %p378 = scmp.lt.s32.totalorder %s39, 1
        %s379 = scalar_select %p378, %s39, 1
        %p380 = scmp.lt.s32.totalorder %s42, 0
        %s381 = scalar_select %p380, %s42, 0
        %s382 = sadd.s32 %s381, %s379
        %s383 = scalar_lea.vmem %s1, %s382
        %s384 = smul.u32 2, %s40
        %s385 = smul.u32 2, %s40
        %s386 = smul.u32 2, %s40
        %p388 = scmp.eq.s32.totalorder %s42, 0
        // Predicated region
        $region49: #{tpu_custom_call.1} parent=35 // pred_check
          %p389 = pneg %p388
        $region50: #{tpu_custom_call.1} parent=35 // pred_check_branch
          %391 = sbr.rel (%p389) target = $region52
        $region51: #{tpu_custom_call.1} parent=35 // pred_region
          %v392 = vld [vmem:[%s316] sm:$0xf]
          %v393 = vld [vmem:[%s316 + $0x4] sm:$0xf]
          %v394 = vunpack.c.l.bf16 %v392
          %v395 = vunpack.c.l.bf16 %v393
          %v396 = vmul.f32 %v394, 0.17677669
          %v397 = vmul.f32 %v395, 0.17677669
          %v398 = vpack.c.bf16 %v396, %v396
          %v399 = vpack.c.bf16 %v397, %v397
          %vm400 = vcmask 257024
          %401 = vst.msk [vmem:[#allocation2] sm:$0xf] %vm400, %v398
          %402 = vst.msk [vmem:[#allocation2 + $0x4] sm:$0xf] %vm400, %v399
          %vm403 = vcmask 7168
          %404 = vst.msk [vmem:[#allocation3] sm:$0xff] %vm403, -inf
          %405 = vst.msk [vmem:[#allocation3 + $0x8] sm:$0xff] %vm403, -inf
          %406 = vst.msk [vmem:[#allocation4] sm:$0xff] %vm403, 0.0
          %407 = vst.msk [vmem:[#allocation4 + $0x8] sm:$0xff] %vm403, 0.0
          %vm408 = vcmask 523264
          %409 = vst.msk [vmem:[#allocation5] sm:$0xff] %vm408, 0.0
        $region52: #{tpu_custom_call.1} parent=35 // pred_fallthru
          _
        %s410 = sshra.s32 %s42, 7
        %s411 = sand.u32 %s42, 127
        %s412 = sadd.s32 %s410, %s39
        %s413 = smul.u32 %s412, 128
        %s414 = sshra.s32 %s42, 7
        %s415 = sand.u32 %s42, 127
        %s416 = sadd.s32 %s413, %s415
        %s417 = sld [smem:[#allocation7 + %s416]]
        %p418 = scmp.ne.s32.totalorder %s417, 0
        // Predicated region
        $region53: #{tpu_custom_call.1} parent=35 // pred_check
          %p419 = pneg %p418
        $region54: #{tpu_custom_call.1} parent=35 // pred_check_branch
          %421 = sbr.rel (%p419) target = $region56
        $region55: #{tpu_custom_call.1} parent=35 // pred_region
          %v422 = vld [vmem:[%s383] sm:$0x1]
          %v423 = vld [vmem:[#allocation2] sm:$0xf]
          %v424 = vld [vmem:[%s326] sm:$0xf]
          %v426 = vperm.slane %v422, 0
          %vm428 = vcmask 261120
          %v430 = vsel %vm428, %v423, 0
          %v433 = vsel %vm428, %v424, 0
          %435 = vmatpush.bf16.xpose.msra.mxu0 0
          %436 = vmatpush.bf16.xpose.msra.mxu0 0
          %437 = vmatpush.bf16.xpose.msra.mxu0 0
          %438 = vmatpush.bf16.xpose.msra.mxu0 0
          %439 = vmatpush.bf16.xpose.msra.mxu0 0
          %440 = vmatpush.bf16.xpose.msra.mxu0 0
          %441 = vmatpush.bf16.xpose.msra.mxu0 0
          %442 = vmatpush.bf16.xpose.msra.mxu0 %v433
          %443 = vmatmul.bf16.gmra.mxu0 %v430
          %v444 = vpop.f32.mrf.mxu0
          %v445 = vadd.f32 %v426, %v444
          %v446 = vpop.f32.mrf.mxu0
          %447 = vdwg.mxu0
          %v448 = vld [vmem:[#allocation3] sm:$0xff]
          %vm449 = vcmask 64512
          %v450 = vsel %vm449, %v445, -inf
          %451 = vmax.xlane.f32.xlu0 %v450
          %v452 = vpop.xlane.xlu0 %451
          %v453 = vmax.f32 %v448, %v452
          %v454 = vsub.f32 %v448, %v453
          %v455 = vmul.f32 %v454, 1.442695
          %v456 = vpow.pop %v455
          %458 = vset.pattern.permute.xlu0 0
          %459 = vperm.xlu0 %458, %v453
          %v460 = vpop.permute.xlu0 %459
          %v462 = vsub.f32 %v445, %v460
          %v463 = vpack.c.bf16 %v462, %v462
          %v464 = vunpack.c.l.bf16 %v463
          %v465 = vmul.f32 %v464, 1.442695
          %v466 = vpow.pop %v465
          %v467 = vpack.c.bf16 %v466, %v466
          %v468 = vld [vmem:[#allocation4] sm:$0xff]
          %v469 = vmul.f32 %v456, %v468
          %v470 = vunpack.c.l.bf16 %v467
          %v471 = vsel %vm449, %v470, 0.0
          %472 = vadd.xlane.f32.xlu0 %v471
          %v473 = vpop.xlane.xlu0 %472
          %v474 = vadd.f32 %v469, %v473
          %vm475 = vcmask 7168
          %476 = vst.msk [vmem:[#allocation4] sm:$0xff] %vm475, %v474
          %477 = vst.msk [vmem:[#allocation3] sm:$0xff] %vm475, %v453
          %v478 = vld [vmem:[%s336] sm:$0xf]
          %v480 = vsel %vm449, %v467, 0
          %vm482 = vcmask 1043456
          %v484 = vsel %vm482, %v478, 0
          %486 = vmatpush.bf16.msra.mxu0 0
          %487 = vmatpush.bf16.msra.mxu0 0
          %488 = vmatpush.bf16.msra.mxu0 0
          %489 = vmatpush.bf16.msra.mxu0 0
          %490 = vmatpush.bf16.msra.mxu0 0
          %491 = vmatpush.bf16.msra.mxu0 0
          %492 = vmatpush.bf16.msra.mxu0 0
          %493 = vmatpush.bf16.msra.mxu0 %v484
          %494 = vmatmul.bf16.gmra.mxu0 %v480
          %v495 = vpop.f32.mrf.mxu0
          %v496 = vadd.f32 0.0, %v495
          %v497 = vpop.f32.mrf.mxu0
          %498 = vdwg.mxu0
          %500 = vset.pattern.permute.xlu0 0
          %501 = vperm.xlu0 %500, %v456
          %v502 = vpop.permute.xlu0 %501
          %s504 = scalar_lea.vmem [#allocation2], 4
          %v505 = vld [vmem:[%s504] sm:$0xf]
          %s506 = scalar_lea.vmem %s326, 4 [#allocation11]
          %v507 = vld [vmem:[%s506] sm:$0xf]
          %v509 = vsel %vm428, %v505, 0
          %v512 = vsel %vm428, %v507, 0
          %514 = vmatpush.bf16.xpose.msra.mxu0 0
          %515 = vmatpush.bf16.xpose.msra.mxu0 0
          %516 = vmatpush.bf16.xpose.msra.mxu0 0
          %517 = vmatpush.bf16.xpose.msra.mxu0 0
          %518 = vmatpush.bf16.xpose.msra.mxu0 0
          %519 = vmatpush.bf16.xpose.msra.mxu0 0
          %520 = vmatpush.bf16.xpose.msra.mxu0 0
          %521 = vmatpush.bf16.xpose.msra.mxu0 %v512
          %522 = vmatmul.bf16.gmra.mxu0 %v509
          %v523 = vpop.f32.mrf.mxu0
          %v524 = vadd.f32 %v426, %v523
          %v525 = vpop.f32.mrf.mxu0
          %526 = vdwg.mxu0
          %s527 = scalar_lea.vmem [#allocation3], 8
          %v528 = vld [vmem:[%s527] sm:$0xff]
          %v529 = vsel %vm449, %v524, -inf
          %530 = vmax.xlane.f32.xlu0 %v529
          %v531 = vpop.xlane.xlu0 %530
          %v532 = vmax.f32 %v528, %v531
          %v533 = vsub.f32 %v528, %v532
          %v534 = vmul.f32 %v533, 1.442695
          %v535 = vpow.pop %v534
          %537 = vset.pattern.permute.xlu0 0
          %538 = vperm.xlu0 %537, %v532
          %v539 = vpop.permute.xlu0 %538
          %v541 = vsub.f32 %v524, %v539
          %v542 = vpack.c.bf16 %v541, %v541
          %v543 = vunpack.c.l.bf16 %v542
          %v544 = vmul.f32 %v543, 1.442695
          %v545 = vpow.pop %v544
          %v546 = vpack.c.bf16 %v545, %v545
          %s547 = scalar_lea.vmem [#allocation4], 8
          %v548 = vld [vmem:[%s547] sm:$0xff]
          %v549 = vmul.f32 %v535, %v548
          %v550 = vunpack.c.l.bf16 %v546
          %v551 = vsel %vm449, %v550, 0.0
          %552 = vadd.xlane.f32.xlu0 %v551
          %v553 = vpop.xlane.xlu0 %552
          %v554 = vadd.f32 %v549, %v553
          %555 = vst.msk [vmem:[%s547] sm:$0xff] %vm475, %v554
          %556 = vst.msk [vmem:[%s527] sm:$0xff] %vm475, %v532
          %s557 = scalar_lea.vmem %s336, 4 [#allocation13]
          %v558 = vld [vmem:[%s557] sm:$0xf]
          %v560 = vsel %vm449, %v546, 0
          %v563 = vsel %vm482, %v558, 0
          %565 = vmatpush.bf16.msra.mxu0 0
          %566 = vmatpush.bf16.msra.mxu0 0
          %567 = vmatpush.bf16.msra.mxu0 0
          %568 = vmatpush.bf16.msra.mxu0 0
          %569 = vmatpush.bf16.msra.mxu0 0
          %570 = vmatpush.bf16.msra.mxu0 0
          %571 = vmatpush.bf16.msra.mxu0 0
          %572 = vmatpush.bf16.msra.mxu0 %v563
          %573 = vmatmul.bf16.gmra.mxu0 %v560
          %v574 = vpop.f32.mrf.mxu0
          %v575 = vadd.f32 0.0, %v574
          %v576 = vpop.f32.mrf.mxu0
          %577 = vdwg.mxu0
          %579 = vset.pattern.permute.xlu0 0
          %580 = vperm.xlu0 %579, %v535
          %v581 = vpop.permute.xlu0 %580
          %584 = vrot.lane.b32.xlu0 %v575, 32
          %v585 = vpop.permute.xlu0 %584
          %v587 = vsel %vm428, %v496, %v585
          %v588 = vsel %vm428, %v502, %v581
          %v589 = vld [vmem:[#allocation5] sm:$0xff]
          %v590 = vmul.f32 %v588, %v589
          %v591 = vadd.f32 %v590, %v587
          %vm592 = vcmask 523264
          %593 = vst.msk [vmem:[#allocation5] sm:$0xff] %vm592, %v591
        $region56: #{tpu_custom_call.1} parent=35 // pred_fallthru
          _
        // Predicated region
        $region57: #{tpu_custom_call.1} parent=35 // pred_check
          %p594 = pneg %p388
        $region58: #{tpu_custom_call.1} parent=35 // pred_check_branch
          %596 = sbr.rel (%p594) target = $region60
        $region59: #{tpu_custom_call.1} parent=35 // pred_region
          %v597 = vld [vmem:[#allocation4] sm:$0xff]
          %vm598 = vcmp.gt.f32.partialorder %v597, 0.0
          %v599 = vsel %vm598, %v597, 1.0
          %v600 = vrcp.pop %v599
          %602 = vset.pattern.permute.xlu0 0
          %603 = vperm.xlu0 %602, %v600
          %v604 = vpop.permute.xlu0 %603
          %s606 = scalar_lea.vmem [#allocation4], 8
          %v607 = vld [vmem:[%s606] sm:$0xff]
          %vm608 = vcmp.gt.f32.partialorder %v607, 0.0
          %v609 = vsel %vm608, %v607, 1.0
          %v610 = vrcp.pop %v609
          %612 = vset.pattern.permute.xlu0 0
          %613 = vperm.xlu0 %612, %v610
          %v614 = vpop.permute.xlu0 %613
          %vm616 = vcmask 261120
          %v617 = vsel %vm616, %v604, %v614
          %v618 = vld [vmem:[#allocation5] sm:$0xff]
          %v619 = vmul.f32 %v618, %v617
          %vm620 = vcmask 523264
          %621 = vst.msk [vmem:[%s377] sm:$0xff] %vm620, %v619
        $region60: #{tpu_custom_call.1} parent=35 // pred_fallthru
          _
        %s622 = sand.u32 %s189, 1
        %s623 = scalar_lea.sflag [#allocation10], %s622
        %s624 = sand.u32 %s189, 1
        %s625 = smul.addr %s624, 8
        %s626 = scalar_lea.vmem [#allocation14], %s625
        // Predicated region
        $region61: #{tpu_custom_call.1} parent=35 // pred_check
          %p627 = pneg %p199
        $region62: #{tpu_custom_call.1} parent=35 // pred_check_branch
          %629 = sbr.rel (%p627) target = $region64
        $region63: #{tpu_custom_call.1} parent=35 // pred_region
          %631 = vsyncadd %s623, 0
          %s632 = sadd.s32 %s41, %s40
          %s633 = sadd.s32 %s632, %s39
          %s634 = smul.addr %s633, 8
          %s635 = scalar_lea.hbm %s5, %s634
          %s637 = sshll.u32 %s626, 4
          %s638 = int_to_ptr.vmem [resolvable:$true] %s637
          %s639 = sshll.u32 %s635, 4
          %s640 = int_to_ptr.hbm [resolvable:$true] %s639
          %642 = dma.vmem_to_hbm [thread:$0]  %s638, 128, %s640, %s623
        $region64: #{tpu_custom_call.1} parent=35 // pred_fallthru
          _
      $region36: #{tpu_custom_call.1} parent=5 // pred_fallthru
        _
      %p643 = scmp.le.s32.totalorder 2, %s28
      // Predicated region
      $region65: #{tpu_custom_call.1} parent=5 // pred_check
        %p644 = pneg %p643
      $region66: #{tpu_custom_call.1} parent=5 // pred_check_branch
        %646 = sbr.rel (%p644) target = $region68
      $region67: #{tpu_custom_call.1} parent=5 // pred_region
        %s647 = ssub.s32 %s28, 2
        // Predicated region
        $region69: #{tpu_custom_call.1} parent=67 // pred_check
          %p648 = pneg %p205
        $region70: #{tpu_custom_call.1} parent=67 // pred_check_branch
          %650 = sbr.rel (%p648) target = $region72
        $region71: #{tpu_custom_call.1} parent=67 // pred_region
          %s651 = sand.u32 %s190, 1
          %s652 = scalar_lea.sflag [#allocation10], %s651
          %s653 = sand.u32 %s190, 1
          %s654 = smul.addr %s653, 8
          %s655 = scalar_lea.vmem [#allocation14], %s654
          %657 = dma.done %s652, 128
        $region72: #{tpu_custom_call.1} parent=67 // pred_fallthru
          _
      $region68: #{tpu_custom_call.1} parent=5 // pred_fallthru
        _
    $region6: #{tpu_custom_call.1} parent=1 // loop_footer
      %s32 = sadd.s32 1, %s28
    $region7: #{tpu_custom_call.1} parent=1 // loop_footer_branch
      %27 = sbr.rel target = $region3
    $region8: #{tpu_custom_call.1} parent=1 // loop_exit
      _
    %658 = vsyncpa [#allocation9], 1
    %s659 = scalar_lea.sflag [#allocation9], 1
    %660 = vsyncpa %s659, 1
    %661 = vsyncpa [#allocation12], 1
    %s662 = scalar_lea.sflag [#allocation12], 1
    %663 = vsyncpa %s662, 1
    %664 = vsyncpa [#allocation10], 1
    %s665 = scalar_lea.sflag [#allocation10], 1
    %666 = vsyncpa %s665, 1

</llo_original>
